<compile_context>
chip_gen: v7x
topology: tpu7x:2x2x1
jax: 0.10.0
libtpu: 0.0.40
codegen_flags: <defaults>
</compile_context>

<pallas_src>
import math
import jax
import jax.numpy as jnp
from jax.experimental import pallas as pl
from jax.experimental.pallas import tpu as pltpu

H_PAD = 128  # lane-dense padded hidden width; lane H_PAD-1 is the constant-1 bias lane


def dqn_kernel(x_ref, w1_ref, b1_ref, w2_ref, wh_ref, q_ref):
    """q = relu(relu(x@W1+b1) @ W2_aug) @ W_head_aug  (biases/dueling folded)."""
    wdt = w1_ref.dtype
    x = x_ref[...].astype(wdt)

    # fc1 + relu; b1_ref lane 127 is 1.0 so h1[:, 127] == 1 (bias lane).
    h1 = jnp.dot(x, w1_ref[...], preferred_element_type=jnp.float32) + b1_ref[...]
    h1 = jnp.maximum(h1, 0.0).astype(wdt)

    # fc2 + relu; W2_aug row 127 carries b2 and keeps the bias lane at 1.
    h2 = jnp.dot(h1, w2_ref[...], preferred_element_type=jnp.float32)
    h2 = jnp.maximum(h2, 0.0).astype(wdt)

    # fused dueling head: W_head_aug = (W_adv - colmean(W_adv)) + W_val, row 127 = bias.
    q = jnp.dot(h2, wh_ref[...], preferred_element_type=jnp.float32)
    q_ref[...] = q.astype(q_ref.dtype)


def prepare_dqn_params(p, dtype=jnp.float32):
    """One-time wrapper-side transform of raw (PyTorch-equivalent) params into
    padded, bias-folded, head-fused weight slabs consumed by the kernel."""
    num_inputs, h1 = p["w1"].shape          # (in, 64)
    h2 = p["w2"].shape[1]                   # 32
    num_actions = p["w_adv"].shape[1]
    assert h1 <= H_PAD - 1 and h2 <= H_PAD - 1

    # Fold the dueling combine (mean over actions is linear in h2) + value head.
    w_head = (p["w_adv"] - jnp.mean(p["w_adv"], axis=1, keepdims=True)) + p["w_val"]
    b_head = (p["b_adv"] - jnp.mean(p["b_adv"], axis=1, keepdims=True)) + p["b_val"]

    w1p = jnp.zeros((num_inputs, H_PAD), jnp.float32).at[:, :h1].set(p["w1"])
    b1p = (jnp.zeros((1, H_PAD), jnp.float32)
           .at[:, :h1].set(p["b1"])
           .at[0, H_PAD - 1].set(1.0))                       # seed the bias lane
    w2p = (jnp.zeros((H_PAD, H_PAD), jnp.float32)
           .at[:h1, :h2].set(p["w2"])
           .at[H_PAD - 1, :h2].set(p["b2"][0])               # b2 folded in
           .at[H_PAD - 1, H_PAD - 1].set(1.0))               # propagate bias lane
    whp = (jnp.zeros((H_PAD, num_actions), jnp.float32)
           .at[:h2, :].set(w_head)
           .at[H_PAD - 1, :].set(b_head[0]))                 # fused head bias folded in

    packed = {"w1": w1p, "b1": b1p, "w2": w2p, "w_head": whp}
    return {k: v.astype(dtype) for k, v in packed.items()}


def dqn_forward(x, prepared, *, tile_b=512):
    """Run the DQNAgent forward pass in one Pallas kernel.

    x: (B, num_inputs) float32 (or bf16)
    prepared: output of prepare_dqn_params(raw_params).
    Small B -> single full-array VMEM block (pure latency path).
    Large B -> grid over batch, weights resident, parallel axis for megacore.
    """
    B, num_inputs = x.shape
    num_actions = prepared["w_head"].shape[-1]
    args = (x, prepared["w1"], prepared["b1"], prepared["w2"], prepared["w_head"])
    out_shape = jax.ShapeDtypeStruct((B, num_actions), jnp.float32)

    if B <= tile_b:
        # Tiny-batch / action-selection path: everything fits trivially in VMEM,
        # no grid -> minimal fixed overhead.
        vmem = pl.BlockSpec(memory_space=pltpu.VMEM)
        return pl.pallas_call(
            dqn_kernel,
            out_shape=out_shape,
            in_specs=[vmem] * len(args),
            out_specs=vmem,
        )(*args)

    # Batched path: stream x/q over the batch dim, keep the (small) weight
    # slabs resident. "parallel" lets v7x shard the batch across its 2 TCs.
    assert tile_b % 8 == 0, "tile_b must be sublane-aligned"
    grid = (pl.cdiv(B, tile_b),)
    return pl.pallas_call(
        dqn_kernel,
        out_shape=out_shape,
        grid=grid,
        in_specs=[
            pl.BlockSpec((tile_b, num_inputs), lambda i: (i, 0)),   # x (streamed)
            pl.BlockSpec((num_inputs, H_PAD), lambda i: (0, 0)),    # W1  (resident)
            pl.BlockSpec((1, H_PAD), lambda i: (0, 0)),             # b1  (resident)
            pl.BlockSpec((H_PAD, H_PAD), lambda i: (0, 0)),         # W2_aug
            pl.BlockSpec((H_PAD, num_actions), lambda i: (0, 0)),   # W_head_aug
        ],
        out_specs=pl.BlockSpec((tile_b, num_actions), lambda i: (i, 0)),
        compiler_params=pltpu.CompilerParams(dimension_semantics=("parallel",)),
    )(*args)


def init_dqn_params(key, num_inputs, num_outputs):
    """Deterministic init matching the PyTorch module: Xavier-uniform weights,
    default Linear bias init U(-1/sqrt(fan_in), 1/sqrt(fan_in)). Weights stored
    (in, out), biases (1, out)."""
    def xavier_uniform(k, fan_in, fan_out):
        bound = math.sqrt(6.0 / (fan_in + fan_out))
        return jax.random.uniform(k, (fan_in, fan_out), jnp.float32, -bound, bound)

    def bias_init(k, fan_in, fan_out):
        bound = 1.0 / math.sqrt(fan_in)
        return jax.random.uniform(k, (1, fan_out), jnp.float32, -bound, bound)

    keys = jax.random.split(key, 8)
    return {
        "w1":    xavier_uniform(keys[0], num_inputs, 64),
        "b1":    bias_init(keys[1], num_inputs, 64),
        "w2":    xavier_uniform(keys[2], 64, 32),
        "b2":    bias_init(keys[3], 64, 32),
        "w_adv": xavier_uniform(keys[4], 32, num_outputs),
        "b_adv": bias_init(keys[5], 32, num_outputs),
        "w_val": xavier_uniform(keys[6], 32, 1),
        "b_val": bias_init(keys[7], 32, 1),
    }


def dqn_forward_ref(x, p):
    """Pure-JAX reference with the ORIGINAL (unfused) semantics."""
    h1 = jnp.maximum(x @ p["w1"] + p["b1"], 0.0)
    h2 = jnp.maximum(h1 @ p["w2"] + p["b2"], 0.0)
    adv = h2 @ p["w_adv"] + p["b_adv"]
    val = h2 @ p["w_val"] + p["b_val"]
    return val + (adv - jnp.mean(adv, axis=1, keepdims=True))


if __name__ == "__main__":
    # CartPole-like sizes: observation dim 4, action dim 2.
    num_inputs, num_outputs, batch = 4, 2, 8

    key = jax.random.PRNGKey(0)
    key_x, key_p, key_b = jax.random.split(key, 3)
    x = jax.random.normal(key_x, (batch, num_inputs), jnp.float32)
    raw_params = init_dqn_params(key_p, num_inputs, num_outputs)
    prepared = prepare_dqn_params(raw_params)            # one-time weight transform

    # Small-batch (action selection) path.
    q = jax.block_until_ready(dqn_forward(x, prepared))
    q_ref = dqn_forward_ref(x, raw_params)
    assert q.shape == (batch, num_outputs)
    assert jnp.allclose(q, q_ref, atol=1e-4, rtol=1e-4), "small-batch mismatch vs reference"

    # Batched (replay-buffer eval) path: grid over B, weights resident.
    big_batch = 1024
    xb = jax.random.normal(key_b, (big_batch, num_inputs), jnp.float32)
    qb = jax.block_until_ready(dqn_forward(xb, prepared, tile_b=512))
    qb_ref = dqn_forward_ref(xb, raw_params)
    assert qb.shape == (big_batch, num_outputs)
    assert jnp.allclose(qb, qb_ref, atol=1e-4, rtol=1e-4), "batched mismatch vs reference"

    # TODO(synk): get_action's argmax could also be fused in-kernel for the RL act loop.
    print("KERNEL_OK")
</pallas_src>

<mosaic_0001>
module attributes {stable_mosaic.version = 11 : i64} {
  func.func @dqn_kernel(%arg0: memref<8x4xf32, #tpu.memory_space<vmem>>, %arg1: memref<4x128xf32, #tpu.memory_space<vmem>>, %arg2: memref<1x128xf32, #tpu.memory_space<vmem>>, %arg3: memref<128x128xf32, #tpu.memory_space<vmem>>, %arg4: memref<128x2xf32, #tpu.memory_space<vmem>>, %arg5: memref<8x2xf32, #tpu.memory_space<vmem>>) attributes {dimension_semantics = [], scalar_prefetch = 0 : i64, scratch_operands = 0 : i64, tpu.core_type = #tpu.core_type<tc>} {
    %c0 = arith.constant 0 : index
    %c0_0 = arith.constant 0 : index
    %0 = vector.load %arg0[%c0, %c0_0] : memref<8x4xf32, #tpu.memory_space<vmem>>, vector<8x4xf32>
    %c0_1 = arith.constant 0 : index
    %c0_2 = arith.constant 0 : index
    %1 = vector.load %arg1[%c0_1, %c0_2] : memref<4x128xf32, #tpu.memory_space<vmem>>, vector<4x128xf32>
    %cst = arith.constant dense<0.000000e+00> : vector<8x128xf32>
    %2 = tpu.matmul %0, %1, %cst {dimension_numbers = #tpu.dot_dimension_numbers<[1], [0], [0], [1], [0, 0, 1, 1], [], []>} : vector<8x4xf32>, vector<4x128xf32>, vector<8x128xf32> -> vector<8x128xf32>
    %c0_3 = arith.constant 0 : index
    %c0_4 = arith.constant 0 : index
    %3 = vector.load %arg2[%c0_3, %c0_4] : memref<1x128xf32, #tpu.memory_space<vmem>>, vector<1x128xf32>
    %4 = vector.broadcast %3 : vector<1x128xf32> to vector<8x128xf32>
    %5 = arith.addf %2, %4 : vector<8x128xf32>
    %cst_5 = arith.constant 0.000000e+00 : f32
    %6 = vector.broadcast %cst_5 : f32 to vector<8x128xf32>
    %7 = arith.maximumf %5, %6 : vector<8x128xf32>
    %c0_6 = arith.constant 0 : index
    %c0_7 = arith.constant 0 : index
    %8 = vector.load %arg3[%c0_6, %c0_7] : memref<128x128xf32, #tpu.memory_space<vmem>>, vector<128x128xf32>
    %cst_8 = arith.constant dense<0.000000e+00> : vector<8x128xf32>
    %9 = tpu.matmul %7, %8, %cst_8 {dimension_numbers = #tpu.dot_dimension_numbers<[1], [0], [0], [1], [0, 0, 1, 1], [], []>} : vector<8x128xf32>, vector<128x128xf32>, vector<8x128xf32> -> vector<8x128xf32>
    %cst_9 = arith.constant 0.000000e+00 : f32
    %10 = vector.broadcast %cst_9 : f32 to vector<8x128xf32>
    %11 = arith.maximumf %9, %10 : vector<8x128xf32>
    %c0_10 = arith.constant 0 : index
    %c0_11 = arith.constant 0 : index
    %12 = vector.load %arg4[%c0_10, %c0_11] : memref<128x2xf32, #tpu.memory_space<vmem>>, vector<128x2xf32>
    %cst_12 = arith.constant dense<0.000000e+00> : vector<8x2xf32>
    %13 = tpu.matmul %11, %12, %cst_12 {dimension_numbers = #tpu.dot_dimension_numbers<[1], [0], [0], [1], [0, 0, 1, 1], [], []>} : vector<8x128xf32>, vector<128x2xf32>, vector<8x2xf32> -> vector<8x2xf32>
    %c0_13 = arith.constant 0 : index
    %c0_14 = arith.constant 0 : index
    %14 = vector.load %arg5[%c0_13, %c0_14] : memref<8x2xf32, #tpu.memory_space<vmem>>, vector<8x2xf32>
    tpu.vector_store %arg5[%c0_13, %c0_14], %13 {strides = array<i32>} : memref<8x2xf32, #tpu.memory_space<vmem>>, vector<8x2xf32>,
    return
  }
}

</mosaic_0001>

<llo_original>
// kernel: tpu_custom_call.1
$region0: #{tpu_custom_call.1}
  #allocation0 [shape = 'u32[]', space=smem, size = 0x4, offset = 0x4, fixed_abs, tag = 'smem constant byte address 0x4 - core index']
  #allocation1 [shape = 'u32[144,128]{1,0:T(1,128)}', space=vmem, size = 0x12000, scoped, tag = 'internal scratch']
  %s0 = inlined_call_operand.vmem [shape: f32[8,4], index: 0, kind: input, shape index: {}]
  %s1 = inlined_call_operand.vmem [shape: f32[4,128], index: 1, kind: input, shape index: {}]
  %s2 = inlined_call_operand.vmem [shape: f32[1,128], index: 2, kind: input, shape index: {}]
  %s3 = inlined_call_operand.vmem [shape: f32[128,128], index: 3, kind: input, shape index: {}]
  %s4 = inlined_call_operand.vmem [shape: f32[128,2], index: 4, kind: input, shape index: {}]
  %s5 = inlined_call_operand.vmem [shape: f32[8,2], index: 5, kind: output, shape index: {}]
  %s6 = sld [smem:[#allocation0]]
  $region30: #{tpu_custom_call.1} parent=0
    _
  %s8 = ssub.s32 1, %s6
  %s9 = scalar_select 0, %s8, %s6
  // Predicated region
  $region2: #{tpu_custom_call.1} parent=0 // pred_check
    _
  $region3: #{tpu_custom_call.1} parent=0 // pred_check_branch
    %11 = sbr.rel (0) target = $region5
  $region4: #{tpu_custom_call.1} parent=0 // pred_region
    _
  $region5: #{tpu_custom_call.1} parent=0 // pred_fallthru
    _
  // Predicated region
  $region6: #{tpu_custom_call.1} parent=0 // pred_check
    _
  $region7: #{tpu_custom_call.1} parent=0 // pred_check_branch
    %13 = sbr.rel (0) target = $region9
  $region8: #{tpu_custom_call.1} parent=0 // pred_region
    _
  $region9: #{tpu_custom_call.1} parent=0 // pred_fallthru
    _
  // Predicated region
  $region10: #{tpu_custom_call.1} parent=0 // pred_check
    _
  $region11: #{tpu_custom_call.1} parent=0 // pred_check_branch
    %15 = sbr.rel (0) target = $region13
  $region12: #{tpu_custom_call.1} parent=0 // pred_region
    _
  $region13: #{tpu_custom_call.1} parent=0 // pred_fallthru
    _
  // Predicated region
  $region14: #{tpu_custom_call.1} parent=0 // pred_check
    _
  $region15: #{tpu_custom_call.1} parent=0 // pred_check_branch
    %17 = sbr.rel (0) target = $region17
  $region16: #{tpu_custom_call.1} parent=0 // pred_region
    _
  $region17: #{tpu_custom_call.1} parent=0 // pred_fallthru
    _
  // Predicated region
  $region18: #{tpu_custom_call.1} parent=0 // pred_check
    _
  $region19: #{tpu_custom_call.1} parent=0 // pred_check_branch
    %19 = sbr.rel (0) target = $region21
  $region20: #{tpu_custom_call.1} parent=0 // pred_region
    _
  $region21: #{tpu_custom_call.1} parent=0 // pred_fallthru
    _
  %v20 = vld [vmem:[%s0] sm:$0xff]
  %v21 = vld [vmem:[%s1] sm:$0xf]
  %v22 = vld [vmem:[%s2] sm:$0x1]
  %v24 = vlaneseq
  %v25 = vshrl.u32 %v24, 7
  %v26 = vsub.s32 0, %v25
  %v27 = vrot.slane %v22, %v26
  %vm29 = vcmask 31744
  %v31 = vsel %vm29, %v20, 0
  %vm33 = vcmask 1043456
  %v35 = vsel %vm33, %v21, 0
  %37 = vmatprep.subr.mxu0 0.0
  %38 = vmatpush1.msra.mxu0 %v35
  %39 = vmatprep.subr.mxu0 0.0
  %40 = vmatpush1.msra.mxu0 0.0
  %41 = vmatprep.subr.mxu0 0.0
  %42 = vmatpush1.msra.mxu0 0.0
  %43 = vmatprep.subr.mxu0 0.0
  %44 = vmatpush1.msra.mxu0 0.0
  %45 = vmatprep.subr.mxu0 0.0
  %46 = vmatpush1.msra.mxu0 0.0
  %47 = vmatprep.subr.mxu0 0.0
  %48 = vmatpush1.msra.mxu0 0.0
  %49 = vmatprep.subr.mxu0 0.0
  %50 = vmatpush1.msra.mxu0 0.0
  %51 = vmatprep.subr.mxu0 0.0
  %52 = vmatpush1.msra.mxu0 0.0
  %53 = vmatprep.subr.mxu0 0.0
  %54 = vmatpush1.msra.mxu0 0.0
  %55 = vmatprep.subr.mxu0 0.0
  %56 = vmatpush1.msra.mxu0 0.0
  %57 = vmatprep.subr.mxu0 0.0
  %58 = vmatpush1.msra.mxu0 0.0
  %59 = vmatprep.subr.mxu0 0.0
  %60 = vmatpush1.msra.mxu0 0.0
  %61 = vmatprep.subr.mxu0 0.0
  %62 = vmatpush1.msra.mxu0 0.0
  %63 = vmatprep.subr.mxu0 0.0
  %64 = vmatpush1.msra.mxu0 0.0
  %65 = vmatprep.subr.mxu0 0.0
  %66 = vmatpush1.msra.mxu0 0.0
  %67 = vmatprep.subr.mxu0 0.0
  %68 = vmatpush1.msra.mxu0 0.0
  %69 = vmatprep.subr.mxu0 0.0
  %70 = vmatpush1.msra.mxu0 0.0
  %71 = vmatprep.subr.mxu0 0.0
  %72 = vmatpush1.msra.mxu0 0.0
  %73 = vmatprep.subr.mxu0 0.0
  %74 = vmatpush1.msra.mxu0 0.0
  %75 = vmatprep.subr.mxu0 0.0
  %76 = vmatpush1.msra.mxu0 0.0
  %77 = vmatprep.subr.mxu0 0.0
  %78 = vmatpush1.msra.mxu0 0.0
  %79 = vmatprep.subr.mxu0 0.0
  %80 = vmatpush1.msra.mxu0 0.0
  %81 = vmatprep.subr.mxu0 0.0
  %82 = vmatpush1.msra.mxu0 0.0
  %83 = vmatprep.subr.mxu0 0.0
  %84 = vmatpush1.msra.mxu0 0.0
  %85 = vmatprep.subr.mxu0 0.0
  %86 = vmatpush1.msra.mxu0 0.0
  %87 = vmatprep.subr.mxu0 0.0
  %88 = vmatpush1.msra.mxu0 0.0
  %89 = vmatprep.subr.mxu0 0.0
  %90 = vmatpush1.msra.mxu0 0.0
  %91 = vmatprep.subr.mxu0 0.0
  %92 = vmatpush1.msra.mxu0 0.0
  %93 = vmatprep.subr.mxu0 0.0
  %94 = vmatpush1.msra.mxu0 0.0
  %95 = vmatprep.subr.mxu0 0.0
  %96 = vmatpush1.msra.mxu0 0.0
  %97 = vmatprep.subr.mxu0 0.0
  %98 = vmatpush1.msra.mxu0 0.0
  %99 = vmatprep.subr.mxu0 0.0
  %100 = vmatpush1.msra.mxu0 0.0
  %101 = vmatprep.mubr.f32.mxu0 0.0
  %102 = vmatmul.mubr.f32.gmra.mrb[0].mxu0 %v31
  %v103 = vpop.f32.mrb[0].mxu0
  %v104 = vadd.f32 %v27, %v103
  %v105 = vpop.f32.mrb[0].mxu0
  %106 = vdwg.mxu0
  %v107 = vmax.f32 %v104, 0.0
  %v108 = vld [vmem:[%s3] sm:$0xff]
  %v109 = vld [vmem:[%s3 + $0x8] sm:$0xff]
  %v110 = vld [vmem:[%s3 + $0x10] sm:$0xff]
  %v111 = vld [vmem:[%s3 + $0x18] sm:$0xff]
  %v112 = vld [vmem:[%s3 + $0x20] sm:$0xff]
  %v113 = vld [vmem:[%s3 + $0x28] sm:$0xff]
  %v114 = vld [vmem:[%s3 + $0x30] sm:$0xff]
  %v115 = vld [vmem:[%s3 + $0x38] sm:$0xff]
  %v116 = vld [vmem:[%s3 + $0x40] sm:$0xff]
  %v117 = vld [vmem:[%s3 + $0x48] sm:$0xff]
  %v118 = vld [vmem:[%s3 + $0x50] sm:$0xff]
  %v119 = vld [vmem:[%s3 + $0x58] sm:$0xff]
  %v120 = vld [vmem:[%s3 + $0x60] sm:$0xff]
  %v121 = vld [vmem:[%s3 + $0x68] sm:$0xff]
  %v122 = vld [vmem:[%s3 + $0x70] sm:$0xff]
  %v123 = vld [vmem:[%s3 + $0x78] sm:$0xff]
  %124 = vmatprep.subr.mxu0 0.0
  %125 = vmatpush1.msra.mxu0 %v108
  %126 = vmatprep.subr.mxu0 0.0
  %127 = vmatpush1.msra.mxu0 %v109
  %128 = vmatprep.subr.mxu0 0.0
  %129 = vmatpush1.msra.mxu0 %v110
  %130 = vmatprep.subr.mxu0 0.0
  %131 = vmatpush1.msra.mxu0 %v111
  %132 = vmatprep.subr.mxu0 0.0
  %133 = vmatpush1.msra.mxu0 %v112
  %134 = vmatprep.subr.mxu0 0.0
  %135 = vmatpush1.msra.mxu0 %v113
  %136 = vmatprep.subr.mxu0 0.0
  %137 = vmatpush1.msra.mxu0 %v114
  %138 = vmatprep.subr.mxu0 0.0
  %139 = vmatpush1.msra.mxu0 %v115
  %140 = vmatprep.subr.mxu0 0.0
  %141 = vmatpush1.msra.mxu0 %v116
  %142 = vmatprep.subr.mxu0 0.0
  %143 = vmatpush1.msra.mxu0 %v117
  %144 = vmatprep.subr.mxu0 0.0
  %145 = vmatpush1.msra.mxu0 %v118
  %146 = vmatprep.subr.mxu0 0.0
  %147 = vmatpush1.msra.mxu0 %v119
  %148 = vmatprep.subr.mxu0 0.0
  %149 = vmatpush1.msra.mxu0 %v120
  %150 = vmatprep.subr.mxu0 0.0
  %151 = vmatpush1.msra.mxu0 %v121
  %152 = vmatprep.subr.mxu0 0.0
  %153 = vmatpush1.msra.mxu0 %v122
  %154 = vmatprep.subr.mxu0 0.0
  %155 = vmatpush1.msra.mxu0 %v123
  %156 = vmatprep.subr.mxu0 0.0
  %157 = vmatpush1.msra.mxu0 0.0
  %158 = vmatprep.subr.mxu0 0.0
  %159 = vmatpush1.msra.mxu0 0.0
  %160 = vmatprep.subr.mxu0 0.0
  %161 = vmatpush1.msra.mxu0 0.0
  %162 = vmatprep.subr.mxu0 0.0
  %163 = vmatpush1.msra.mxu0 0.0
  %164 = vmatprep.subr.mxu0 0.0
  %165 = vmatpush1.msra.mxu0 0.0
  %166 = vmatprep.subr.mxu0 0.0
  %167 = vmatpush1.msra.mxu0 0.0
  %168 = vmatprep.subr.mxu0 0.0
  %169 = vmatpush1.msra.mxu0 0.0
  %170 = vmatprep.subr.mxu0 0.0
  %171 = vmatpush1.msra.mxu0 0.0
  %172 = vmatprep.subr.mxu0 0.0
  %173 = vmatpush1.msra.mxu0 0.0
  %174 = vmatprep.subr.mxu0 0.0
  %175 = vmatpush1.msra.mxu0 0.0
  %176 = vmatprep.subr.mxu0 0.0
  %177 = vmatpush1.msra.mxu0 0.0
  %178 = vmatprep.subr.mxu0 0.0
  %179 = vmatpush1.msra.mxu0 0.0
  %180 = vmatprep.subr.mxu0 0.0
  %181 = vmatpush1.msra.mxu0 0.0
  %182 = vmatprep.subr.mxu0 0.0
  %183 = vmatpush1.msra.mxu0 0.0
  %184 = vmatprep.subr.mxu0 0.0
  %185 = vmatpush1.msra.mxu0 0.0
  %186 = vmatprep.subr.mxu0 0.0
  %187 = vmatpush1.msra.mxu0 0.0
  %188 = vmatprep.mubr.f32.mxu0 0.0
  %189 = vmatmul.mubr.f32.gmra.mrb[0].mxu0 %v107
  %v190 = vpop.f32.mrb[0].mxu0
  %v191 = vadd.f32 0.0, %v190
  %v192 = vpop.f32.mrb[0].mxu0
  %193 = vdwg.mxu0
  %v194 = vmax.f32 %v191, 0.0
  %v195 = vld [vmem:[%s4] sm:$0xff]
  %v196 = vld [vmem:[%s4 + $0x8] sm:$0xff]
  %v197 = vld [vmem:[%s4 + $0x10] sm:$0xff]
  %v198 = vld [vmem:[%s4 + $0x18] sm:$0xff]
  %v199 = vld [vmem:[%s4 + $0x20] sm:$0xff]
  %v200 = vld [vmem:[%s4 + $0x28] sm:$0xff]
  %v201 = vld [vmem:[%s4 + $0x30] sm:$0xff]
  %v202 = vld [vmem:[%s4 + $0x38] sm:$0xff]
  %v203 = vld [vmem:[%s4 + $0x40] sm:$0xff]
  %v204 = vld [vmem:[%s4 + $0x48] sm:$0xff]
  %v205 = vld [vmem:[%s4 + $0x50] sm:$0xff]
  %v206 = vld [vmem:[%s4 + $0x58] sm:$0xff]
  %v207 = vld [vmem:[%s4 + $0x60] sm:$0xff]
  %v208 = vld [vmem:[%s4 + $0x68] sm:$0xff]
  %v209 = vld [vmem:[%s4 + $0x70] sm:$0xff]
  %v210 = vld [vmem:[%s4 + $0x78] sm:$0xff]
  %211 = vmatprep.subr.mxu0 0.0
  %212 = vmatpush1.msra.mxu0 %v195
  %213 = vmatprep.subr.mxu0 0.0
  %214 = vmatpush1.msra.mxu0 %v196
  %215 = vmatprep.subr.mxu0 0.0
  %216 = vmatpush1.msra.mxu0 %v197
  %217 = vmatprep.subr.mxu0 0.0
  %218 = vmatpush1.msra.mxu0 %v198
  %219 = vmatprep.subr.mxu0 0.0
  %220 = vmatpush1.msra.mxu0 %v199
  %221 = vmatprep.subr.mxu0 0.0
  %222 = vmatpush1.msra.mxu0 %v200
  %223 = vmatprep.subr.mxu0 0.0
  %224 = vmatpush1.msra.mxu0 %v201
  %225 = vmatprep.subr.mxu0 0.0
  %226 = vmatpush1.msra.mxu0 %v202
  %227 = vmatprep.subr.mxu0 0.0
  %228 = vmatpush1.msra.mxu0 %v203
  %229 = vmatprep.subr.mxu0 0.0
  %230 = vmatpush1.msra.mxu0 %v204
  %231 = vmatprep.subr.mxu0 0.0
  %232 = vmatpush1.msra.mxu0 %v205
  %233 = vmatprep.subr.mxu0 0.0
  %234 = vmatpush1.msra.mxu0 %v206
  %235 = vmatprep.subr.mxu0 0.0
  %236 = vmatpush1.msra.mxu0 %v207
  %237 = vmatprep.subr.mxu0 0.0
  %238 = vmatpush1.msra.mxu0 %v208
  %239 = vmatprep.subr.mxu0 0.0
  %240 = vmatpush1.msra.mxu0 %v209
  %241 = vmatprep.subr.mxu0 0.0
  %242 = vmatpush1.msra.mxu0 %v210
  %243 = vmatprep.subr.mxu0 0.0
  %244 = vmatpush1.msra.mxu0 0.0
  %245 = vmatprep.subr.mxu0 0.0
  %246 = vmatpush1.msra.mxu0 0.0
  %247 = vmatprep.subr.mxu0 0.0
  %248 = vmatpush1.msra.mxu0 0.0
  %249 = vmatprep.subr.mxu0 0.0
  %250 = vmatpush1.msra.mxu0 0.0
  %251 = vmatprep.subr.mxu0 0.0
  %252 = vmatpush1.msra.mxu0 0.0
  %253 = vmatprep.subr.mxu0 0.0
  %254 = vmatpush1.msra.mxu0 0.0
  %255 = vmatprep.subr.mxu0 0.0
  %256 = vmatpush1.msra.mxu0 0.0
  %257 = vmatprep.subr.mxu0 0.0
  %258 = vmatpush1.msra.mxu0 0.0
  %259 = vmatprep.subr.mxu0 0.0
  %260 = vmatpush1.msra.mxu0 0.0
  %261 = vmatprep.subr.mxu0 0.0
  %262 = vmatpush1.msra.mxu0 0.0
  %263 = vmatprep.subr.mxu0 0.0
  %264 = vmatpush1.msra.mxu0 0.0
  %265 = vmatprep.subr.mxu0 0.0
  %266 = vmatpush1.msra.mxu0 0.0
  %267 = vmatprep.subr.mxu0 0.0
  %268 = vmatpush1.msra.mxu0 0.0
  %269 = vmatprep.subr.mxu0 0.0
  %270 = vmatpush1.msra.mxu0 0.0
  %271 = vmatprep.subr.mxu0 0.0
  %272 = vmatpush1.msra.mxu0 0.0
  %273 = vmatprep.subr.mxu0 0.0
  %274 = vmatpush1.msra.mxu0 0.0
  %275 = vmatprep.mubr.f32.mxu0 0.0
  %276 = vmatmul.mubr.f32.gmra.mrb[0].mxu0 %v194
  %v277 = vpop.f32.mrb[0].mxu0
  %v278 = vadd.f32 0.0, %v277
  %v279 = vpop.f32.mrb[0].mxu0
  %280 = vdwg.mxu0
  %vm281 = vcmask 15360
  %282 = vst.msk [vmem:[%s5] sm:$0xff] %vm281, %v278
  // Predicated region
  $region22: #{tpu_custom_call.1} parent=0 // pred_check
    _
  $region23: #{tpu_custom_call.1} parent=0 // pred_check_branch
    %284 = sbr.rel (0) target = $region25
  $region24: #{tpu_custom_call.1} parent=0 // pred_region
    _
  $region25: #{tpu_custom_call.1} parent=0 // pred_fallthru
    _
  // Predicated region
  $region26: #{tpu_custom_call.1} parent=0 // pred_check
    _
  $region27: #{tpu_custom_call.1} parent=0 // pred_check_branch
    %286 = sbr.rel (0) target = $region29
  $region28: #{tpu_custom_call.1} parent=0 // pred_region
    _
  $region29: #{tpu_custom_call.1} parent=0 // pred_fallthru
    _

</llo_original>
